<compile_context>
chip_gen: v7x
topology: tpu7x:2x2x1
jax: 0.10.0
libtpu: 0.0.40
codegen_flags: <defaults>
</compile_context>

<pallas_src>
import functools

import jax
import jax.numpy as jnp
from jax.experimental import pallas as pl
from jax.experimental.pallas import tpu as pltpu


def _round_up(x, m):
    return ((x + m - 1) // m) * m


def _mlp_kernel(num_layers, compute_dtype, *refs):
    """refs = (x_ref, w0, b0, w1, b1, ..., out_ref)."""
    x_ref = refs[0]
    out_ref = refs[-1]
    param_refs = refs[1:-1]

    h = x_ref[...]
    for i in range(num_layers):
        w = param_refs[2 * i][...]          # already compute_dtype (bf16)
        b = param_refs[2 * i + 1][...]      # f32, shape (1, d_out)
        # bf16 operands, f32 accumulation on the MXU.
        h = jnp.dot(h.astype(compute_dtype), w,
                    preferred_element_type=jnp.float32) + b
        if i < num_layers - 1:              # ReLU on all but the last layer
            h = jnp.maximum(h, 0.0)
    out_ref[...] = h.astype(out_ref.dtype)


def mlp_pallas(x2d, weights, biases, *, max_tile_m=512,
               compute_dtype=jnp.bfloat16,
               vmem_budget_bytes=40 * 1024 * 1024):
    """x2d: (M, in_dim). weights[i]: (d_in_i, d_out_i). biases[i]: (1, d_out_i)."""
    num_layers = len(weights)
    M, in_dim = x2d.shape
    out_dim = weights[-1].shape[1]

    # Cast weights once outside the kernel: halves HBM->VMEM DMA bytes and the
    # resident-weight VMEM footprint; accumulation stays f32 inside the kernel.
    w_cast = [w.astype(compute_dtype) for w in weights]

    # Weights/biases use a constant index_map, so they stay resident across the
    # row grid (no re-DMA), but each input BlockSpec is still double-buffered
    # -> charge 2x when budgeting VMEM.
    # NOTE: for much larger MLPs, single-buffer the resident weights
    # (pipeline_mode=pl.Buffered(1) or pl.ANY + one manual DMA) to reclaim
    # that 2x; not needed at these parameter sizes.
    param_bytes = 2 * sum(w.size * w.dtype.itemsize for w in w_cast)
    param_bytes += 2 * sum(b.size * b.dtype.itemsize for b in biases)
    max_feat = max([in_dim, out_dim] + [w.shape[1] for w in weights])

    def vmem_bytes(tm):
        io = 2 * tm * in_dim * x2d.dtype.itemsize    # double-buffered x tile
        io += 2 * tm * out_dim * x2d.dtype.itemsize  # double-buffered out tile
        act = 2 * tm * max_feat * 4                  # f32 intermediates + headroom
        return io + act + param_bytes

    # Largest row tile (multiple of 8) covering M in one step when possible,
    # capped at max_tile_m and shrunk to respect the VMEM budget (sized for
    # v7x's 64 MiB physical VMEM; v5e/v6e have 128 MiB so it fits there too).
    tile_m = min(_round_up(M, 8), _round_up(max_tile_m, 8))
    while tile_m > 8 and vmem_bytes(tile_m) > vmem_budget_bytes:
        tile_m -= 8

    grid = (pl.cdiv(M, tile_m),)

    in_specs = [pl.BlockSpec((tile_m, in_dim), lambda i: (i, 0))]
    params = []
    for w, b in zip(w_cast, biases):
        # Full (untiled) weight / bias blocks, constant block index across grid.
        in_specs.append(pl.BlockSpec(w.shape, lambda i: (0, 0)))
        in_specs.append(pl.BlockSpec(b.shape, lambda i: (0, 0)))
        params += [w, b]
    out_specs = pl.BlockSpec((tile_m, out_dim), lambda i: (i, 0))

    flops = 2 * M * sum(w.shape[0] * w.shape[1] for w in weights)
    bytes_accessed = (x2d.size * x2d.dtype.itemsize
                      + sum(p.size * p.dtype.itemsize for p in params)
                      + M * out_dim * x2d.dtype.itemsize)
    cost = pl.CostEstimate(flops=flops, transcendentals=0,
                           bytes_accessed=bytes_accessed)

    # Explicit scoped-VMEM limit: defaults are only 16 MiB (v5e) / 32 MiB
    # (v6e/v7x); give the actual footprint plus headroom, capped below v7x's
    # 64 MiB physical VMEM.
    vmem_limit = int(min(64 * 1024 * 1024,
                         max(32 * 1024 * 1024, 1.5 * vmem_bytes(tile_m))))

    kernel = functools.partial(_mlp_kernel, num_layers, compute_dtype)
    return pl.pallas_call(
        kernel,
        out_shape=jax.ShapeDtypeStruct((M, out_dim), x2d.dtype),
        grid_spec=pltpu.PrefetchScalarGridSpec(
            num_scalar_prefetch=0,
            grid=grid,
            in_specs=in_specs,
            out_specs=out_specs,
        ),
        compiler_params=pltpu.CompilerParams(
            dimension_semantics=("parallel",),
            vmem_limit_bytes=vmem_limit,
        ),
        cost_estimate=cost,
    )(x2d, *params)


class MLP:
    """JAX/Pallas port of the RT-DETR MLP (Linear + ReLU chain)."""

    def __init__(self, in_dim, hidden_dim, out_dim, num_layers, key):
        self.num_layers = num_layers
        h = [hidden_dim] * (num_layers - 1)
        dims = list(zip([in_dim] + h, h + [out_dim]))
        self.weights = []
        self.biases = []
        for n, k in dims:
            key, wk, bk = jax.random.split(key, 3)
            bound = 1.0 / (n ** 0.5)  # PyTorch nn.Linear default init
            w = jax.random.uniform(wk, (n, k), jnp.float32, -bound, bound)
            b = jax.random.uniform(bk, (1, k), jnp.float32, -bound, bound)
            self.weights.append(w)
            self.biases.append(b)

    def __call__(self, x):
        # x: (..., in_dim)
        lead = x.shape[:-1]
        x2d = x.reshape(-1, x.shape[-1])
        y2d = mlp_pallas(x2d, self.weights, self.biases)
        return y2d.reshape(*lead, y2d.shape[-1])

    def reference(self, x):
        h = x
        for i, (w, b) in enumerate(zip(self.weights, self.biases)):
            h = h @ w + b[0]
            if i < self.num_layers - 1:
                h = jnp.maximum(h, 0.0)
        return h


if __name__ == "__main__":
    key = jax.random.PRNGKey(0)
    k_params, k_x = jax.random.split(key)

    B, N, IN_DIM, HIDDEN, OUT_DIM, NUM_LAYERS = 2, 8, 32, 64, 16, 3
    model = MLP(IN_DIM, HIDDEN, OUT_DIM, NUM_LAYERS, k_params)

    x = jax.random.normal(k_x, (B, N, IN_DIM), jnp.float32)

    y = model(x)
    y = jax.block_until_ready(y)

    y_ref = model.reference(x)
    assert y.shape == (B, N, OUT_DIM), y.shape
    # bf16 operands with f32 accumulation -> small numeric drift vs f32 reference.
    assert jnp.allclose(y, y_ref, atol=5e-2, rtol=5e-2), "mismatch vs reference"

    print("KERNEL_OK")
</pallas_src>

<mosaic_0001>
module attributes {stable_mosaic.version = 11 : i64} {
  func.func @_mlp_kernel(%arg0: i32, %arg1: memref<16x32xf32, #tpu.memory_space<vmem>>, %arg2: memref<32x64xbf16, #tpu.memory_space<vmem>>, %arg3: memref<1x64xf32, #tpu.memory_space<vmem>>, %arg4: memref<64x64xbf16, #tpu.memory_space<vmem>>, %arg5: memref<1x64xf32, #tpu.memory_space<vmem>>, %arg6: memref<64x16xbf16, #tpu.memory_space<vmem>>, %arg7: memref<1x16xf32, #tpu.memory_space<vmem>>, %arg8: memref<16x16xf32, #tpu.memory_space<vmem>>) attributes {dimension_semantics = [#tpu.dimension_semantics<parallel>], iteration_bounds = array<i64: 1>, scalar_prefetch = 0 : i64, scratch_operands = 0 : i64, tpu.core_type = #tpu.core_type<tc>, window_params = [{transform_indices = @transform_0, window_bounds = array<i64: 16, 32>}, {pipeline_mode = #tpu.pipeline_mode<synchronous>, transform_indices = @transform_1, window_bounds = array<i64: 32, 64>}, {pipeline_mode = #tpu.pipeline_mode<synchronous>, transform_indices = @transform_2, window_bounds = array<i64: 1, 64>}, {pipeline_mode = #tpu.pipeline_mode<synchronous>, transform_indices = @transform_3, window_bounds = array<i64: 64, 64>}, {pipeline_mode = #tpu.pipeline_mode<synchronous>, transform_indices = @transform_4, window_bounds = array<i64: 1, 64>}, {pipeline_mode = #tpu.pipeline_mode<synchronous>, transform_indices = @transform_5, window_bounds = array<i64: 64, 16>}, {pipeline_mode = #tpu.pipeline_mode<synchronous>, transform_indices = @transform_6, window_bounds = array<i64: 1, 16>}, {transform_indices = @transform_7, window_bounds = array<i64: 16, 16>}]} {
    %c0 = arith.constant 0 : index
    %c0_0 = arith.constant 0 : index
    %0 = vector.load %arg1[%c0, %c0_0] : memref<16x32xf32, #tpu.memory_space<vmem>>, vector<16x32xf32>
    %c0_1 = arith.constant 0 : index
    %c0_2 = arith.constant 0 : index
    %1 = vector.load %arg2[%c0_1, %c0_2] : memref<32x64xbf16, #tpu.memory_space<vmem>>, vector<32x64xbf16>
    %c0_3 = arith.constant 0 : index
    %c0_4 = arith.constant 0 : index
    %2 = vector.load %arg3[%c0_3, %c0_4] : memref<1x64xf32, #tpu.memory_space<vmem>>, vector<1x64xf32>
    %3 = arith.truncf %0 : vector<16x32xf32> to vector<16x32xbf16>
    %cst = arith.constant dense<0.000000e+00> : vector<16x64xf32>
    %4 = tpu.matmul %3, %1, %cst {dimension_numbers = #tpu.dot_dimension_numbers<[1], [0], [0], [1], [0, 0, 1, 1], [], []>} : vector<16x32xbf16>, vector<32x64xbf16>, vector<16x64xf32> -> vector<16x64xf32>
    %5 = vector.broadcast %2 : vector<1x64xf32> to vector<16x64xf32>
    %6 = arith.addf %4, %5 : vector<16x64xf32>
    %cst_5 = arith.constant 0.000000e+00 : f32
    %7 = vector.broadcast %cst_5 : f32 to vector<16x64xf32>
    %8 = arith.maximumf %6, %7 : vector<16x64xf32>
    %c0_6 = arith.constant 0 : index
    %c0_7 = arith.constant 0 : index
    %9 = vector.load %arg4[%c0_6, %c0_7] : memref<64x64xbf16, #tpu.memory_space<vmem>>, vector<64x64xbf16>
    %c0_8 = arith.constant 0 : index
    %c0_9 = arith.constant 0 : index
    %10 = vector.load %arg5[%c0_8, %c0_9] : memref<1x64xf32, #tpu.memory_space<vmem>>, vector<1x64xf32>
    %11 = arith.truncf %8 : vector<16x64xf32> to vector<16x64xbf16>
    %cst_10 = arith.constant dense<0.000000e+00> : vector<16x64xf32>
    %12 = tpu.matmul %11, %9, %cst_10 {dimension_numbers = #tpu.dot_dimension_numbers<[1], [0], [0], [1], [0, 0, 1, 1], [], []>} : vector<16x64xbf16>, vector<64x64xbf16>, vector<16x64xf32> -> vector<16x64xf32>
    %13 = vector.broadcast %10 : vector<1x64xf32> to vector<16x64xf32>
    %14 = arith.addf %12, %13 : vector<16x64xf32>
    %cst_11 = arith.constant 0.000000e+00 : f32
    %15 = vector.broadcast %cst_11 : f32 to vector<16x64xf32>
    %16 = arith.maximumf %14, %15 : vector<16x64xf32>
    %c0_12 = arith.constant 0 : index
    %c0_13 = arith.constant 0 : index
    %17 = vector.load %arg6[%c0_12, %c0_13] : memref<64x16xbf16, #tpu.memory_space<vmem>>, vector<64x16xbf16>
    %c0_14 = arith.constant 0 : index
    %c0_15 = arith.constant 0 : index
    %18 = vector.load %arg7[%c0_14, %c0_15] : memref<1x16xf32, #tpu.memory_space<vmem>>, vector<1x16xf32>
    %19 = arith.truncf %16 : vector<16x64xf32> to vector<16x64xbf16>
    %cst_16 = arith.constant dense<0.000000e+00> : vector<16x16xf32>
    %20 = tpu.matmul %19, %17, %cst_16 {dimension_numbers = #tpu.dot_dimension_numbers<[1], [0], [0], [1], [0, 0, 1, 1], [], []>} : vector<16x64xbf16>, vector<64x16xbf16>, vector<16x16xf32> -> vector<16x16xf32>
    %21 = vector.broadcast %18 : vector<1x16xf32> to vector<16x16xf32>
    %22 = arith.addf %20, %21 : vector<16x16xf32>
    %c0_17 = arith.constant 0 : index
    %c0_18 = arith.constant 0 : index
    %23 = vector.load %arg8[%c0_17, %c0_18] : memref<16x16xf32, #tpu.memory_space<vmem>>, vector<16x16xf32>
    tpu.vector_store %arg8[%c0_17, %c0_18], %22 {strides = array<i32>} : memref<16x16xf32, #tpu.memory_space<vmem>>, vector<16x16xf32>,
    return
  }
  func.func @transform_0(%arg0: i32) -> (i32, i32) {
    %c0_i32 = arith.constant 0 : i32
    %c0_i32_0 = arith.constant 0 : i32
    return %arg0, %c0_i32 : i32, i32
  }
  func.func @transform_1(%arg0: i32) -> (i32, i32) {
    %c0_i32 = arith.constant 0 : i32
    %c0_i32_0 = arith.constant 0 : i32
    %c0_i32_1 = arith.constant 0 : i32
    return %c0_i32, %c0_i32_0 : i32, i32
  }
  func.func @transform_2(%arg0: i32) -> (i32, i32) {
    %c0_i32 = arith.constant 0 : i32
    %c0_i32_0 = arith.constant 0 : i32
    %c0_i32_1 = arith.constant 0 : i32
    return %c0_i32, %c0_i32_0 : i32, i32
  }
  func.func @transform_3(%arg0: i32) -> (i32, i32) {
    %c0_i32 = arith.constant 0 : i32
    %c0_i32_0 = arith.constant 0 : i32
    %c0_i32_1 = arith.constant 0 : i32
    return %c0_i32, %c0_i32_0 : i32, i32
  }
  func.func @transform_4(%arg0: i32) -> (i32, i32) {
    %c0_i32 = arith.constant 0 : i32
    %c0_i32_0 = arith.constant 0 : i32
    %c0_i32_1 = arith.constant 0 : i32
    return %c0_i32, %c0_i32_0 : i32, i32
  }
  func.func @transform_5(%arg0: i32) -> (i32, i32) {
    %c0_i32 = arith.constant 0 : i32
    %c0_i32_0 = arith.constant 0 : i32
    %c0_i32_1 = arith.constant 0 : i32
    return %c0_i32, %c0_i32_0 : i32, i32
  }
  func.func @transform_6(%arg0: i32) -> (i32, i32) {
    %c0_i32 = arith.constant 0 : i32
    %c0_i32_0 = arith.constant 0 : i32
    %c0_i32_1 = arith.constant 0 : i32
    return %c0_i32, %c0_i32_0 : i32, i32
  }
  func.func @transform_7(%arg0: i32) -> (i32, i32) {
    %c0_i32 = arith.constant 0 : i32
    %c0_i32_0 = arith.constant 0 : i32
    return %arg0, %c0_i32 : i32, i32
  }
}

</mosaic_0001>

<llo_original>
// kernel: tpu_custom_call.1
$region0: #{tpu_custom_call.1}
  #allocation0 [shape = 'u32[]', space=smem, size = 0x4, offset = 0x4, fixed_abs, tag = 'smem constant byte address 0x4 - core index']
  #allocation1 [shape = 'u32[144,128]{1,0:T(1,128)}', space=vmem, size = 0x12000, scoped, tag = 'internal scratch']
  %s0 = inlined_call_operand.vmem [shape: f32[16,32], index: 0, kind: input, shape index: {}]
  %s1 = inlined_call_operand.hbm [shape: bf16[32,64], index: 1, kind: input, shape index: {}]
  %s2 = inlined_call_operand.vmem [shape: f32[1,64], index: 2, kind: input, shape index: {}]
  %s3 = inlined_call_operand.vmem [shape: bf16[64,64], index: 3, kind: input, shape index: {}]
  %s4 = inlined_call_operand.vmem [shape: f32[1,64], index: 4, kind: input, shape index: {}]
  %s5 = inlined_call_operand.vmem [shape: bf16[64,16], index: 5, kind: input, shape index: {}]
  %s6 = inlined_call_operand.vmem [shape: f32[1,16], index: 6, kind: input, shape index: {}]
  %s7 = inlined_call_operand.hbm [shape: f32[16,16], index: 7, kind: output, shape index: {}]
  %s8 = sld [smem:[#allocation0]]
  $region42: #{tpu_custom_call.1} parent=0
    _
  %s10 = ssub.s32 1, %s8
  %s11 = scalar_select 0, %s10, %s8
  $region1: #{tpu_custom_call.1} parent=0
    #allocation2 [shape = 'u8[8192]{0}', space=vmem, size = 0x2000, scoped, tag = 'input window, operand 1, single buffered']
    #allocation3 [shape = 's32[1]{0}', space=sflag, size = 0x4, scoped, tag = 'scoped memory for tpu_custom_call.1']
    #allocation4 [shape = 's32[1]{0}', space=sflag, size = 0x4, scoped, tag = 'scoped memory for tpu_custom_call.1']
    #allocation5 [shape = 'u8[8192]{0}', space=vmem, size = 0x2000, scoped, tag = 'output window, operand 0, single buffered']
    %12 = vsyncpa [#allocation3], 0
    %13 = vsyncpa [#allocation4], 0
    // Predicated region
    $region2: #{tpu_custom_call.1} parent=1 // pred_check
      _
    $region3: #{tpu_custom_call.1} parent=1 // pred_check_branch
      %15 = sbr.rel (0) target = $region5
    $region4: #{tpu_custom_call.1} parent=1 // pred_region
      _
    $region5: #{tpu_custom_call.1} parent=1 // pred_fallthru
      _
    // Predicated region
    $region6: #{tpu_custom_call.1} parent=1 // pred_check
      _
    $region7: #{tpu_custom_call.1} parent=1 // pred_check_branch
      %17 = sbr.rel (0) target = $region9
    $region8: #{tpu_custom_call.1} parent=1 // pred_region
      %s19 = ssub.s32 256, 256
      %20 = vsyncadd [#allocation3], %s19
      %s21 = sshll.u32 [#allocation2], 4
      %s22 = int_to_ptr.vmem [resolvable:$true] %s21
      %27 = dma.hbm_to_vmem [thread:$0]  %s1, 256, %s22, [#allocation3], 64, 64, 4
    $region9: #{tpu_custom_call.1} parent=1 // pred_fallthru
      _
    // Predicated region
    $region10: #{tpu_custom_call.1} parent=1 // pred_check
      _
    $region11: #{tpu_custom_call.1} parent=1 // pred_check_branch
      %29 = sbr.rel (0) target = $region13
    $region12: #{tpu_custom_call.1} parent=1 // pred_region
      _
    $region13: #{tpu_custom_call.1} parent=1 // pred_fallthru
      _
    // Predicated region
    $region14: #{tpu_custom_call.1} parent=1 // pred_check
      _
    $region15: #{tpu_custom_call.1} parent=1 // pred_check_branch
      %31 = sbr.rel (0) target = $region17
    $region16: #{tpu_custom_call.1} parent=1 // pred_region
      _
    $region17: #{tpu_custom_call.1} parent=1 // pred_fallthru
      _
    // Predicated region
    $region18: #{tpu_custom_call.1} parent=1 // pred_check
      _
    $region19: #{tpu_custom_call.1} parent=1 // pred_check_branch
      %33 = sbr.rel (0) target = $region21
    $region20: #{tpu_custom_call.1} parent=1 // pred_region
      _
    $region21: #{tpu_custom_call.1} parent=1 // pred_fallthru
      _
    // Predicated region
    $region22: #{tpu_custom_call.1} parent=1 // pred_check
      _
    $region23: #{tpu_custom_call.1} parent=1 // pred_check_branch
      %35 = sbr.rel (0) target = $region25
    $region24: #{tpu_custom_call.1} parent=1 // pred_region
      _
    $region25: #{tpu_custom_call.1} parent=1 // pred_fallthru
      _
    // Predicated region
    $region26: #{tpu_custom_call.1} parent=1 // pred_check
      _
    $region27: #{tpu_custom_call.1} parent=1 // pred_check_branch
      %37 = sbr.rel (0) target = $region29
    $region28: #{tpu_custom_call.1} parent=1 // pred_region
      _
    $region29: #{tpu_custom_call.1} parent=1 // pred_fallthru
      _
    // Predicated region
    $region30: #{tpu_custom_call.1} parent=1 // pred_check
      _
    $region31: #{tpu_custom_call.1} parent=1 // pred_check_branch
      %39 = sbr.rel (0) target = $region33
    $region32: #{tpu_custom_call.1} parent=1 // pred_region
      %40 = dma.done [#allocation3], 256
    $region33: #{tpu_custom_call.1} parent=1 // pred_fallthru
      _
    %v42 = vld [vmem:[%s0] sm:$0xff]
    %v43 = vld [vmem:[%s0 + $0x8] sm:$0xff]
    %v44 = vld [vmem:[#allocation2] sm:$0xf]
    %v45 = vld [vmem:[#allocation2 + $0x4] sm:$0xf]
    %v46 = vld [vmem:[#allocation2 + $0x8] sm:$0xf]
    %v47 = vld [vmem:[#allocation2 + $0xc] sm:$0xf]
    %v48 = vld [vmem:[%s2] sm:$0x1]
    %v49 = vpack.c.bf16 %v43, %v42
    %v51 = vlaneseq
    %v52 = vshrl.u32 %v51, 7
    %v53 = vsub.s32 0, %v52
    %v54 = vrot.slane %v48, %v53
    %v60 = vunpack.c.l.b16 %v44
    %v61 = vunpack.c.l.b16 %v45
    %v62 = vunpack.c.l.b16 %v46
    %v63 = vunpack.c.l.b16 %v47
    %v64 = vpack.c.b16 %v61, %v60
    %v65 = vpack.c.b16 %v63, %v62
    %vm68 = vcmask 261120
    %v70 = vsel %vm68, %v49, 0
    %72 = vmatprep.subr.bf16.mxu0 0
    %73 = vmatpush1.bf16.msra.mxu0 %v64
    %74 = vmatprep.subr.bf16.mxu0 0
    %75 = vmatpush1.bf16.msra.mxu0 %v65
    %76 = vmatprep.subr.bf16.mxu0 0
    %77 = vmatpush1.bf16.msra.mxu0 0
    %78 = vmatprep.subr.bf16.mxu0 0
    %79 = vmatpush1.bf16.msra.mxu0 0
    %80 = vmatprep.subr.bf16.mxu0 0
    %81 = vmatpush1.bf16.msra.mxu0 0
    %82 = vmatprep.subr.bf16.mxu0 0
    %83 = vmatpush1.bf16.msra.mxu0 0
    %84 = vmatprep.subr.bf16.mxu0 0
    %85 = vmatpush1.bf16.msra.mxu0 0
    %86 = vmatprep.subr.bf16.mxu0 0
    %87 = vmatpush1.bf16.msra.mxu0 0
    %88 = vmatprep.subr.bf16.mxu0 0
    %89 = vmatpush1.bf16.msra.mxu0 0
    %90 = vmatprep.subr.bf16.mxu0 0
    %91 = vmatpush1.bf16.msra.mxu0 0
    %92 = vmatprep.subr.bf16.mxu0 0
    %93 = vmatpush1.bf16.msra.mxu0 0
    %94 = vmatprep.subr.bf16.mxu0 0
    %95 = vmatpush1.bf16.msra.mxu0 0
    %96 = vmatprep.subr.bf16.mxu0 0
    %97 = vmatpush1.bf16.msra.mxu0 0
    %98 = vmatprep.subr.bf16.mxu0 0
    %99 = vmatpush1.bf16.msra.mxu0 0
    %100 = vmatprep.subr.bf16.mxu0 0
    %101 = vmatpush1.bf16.msra.mxu0 0
    %102 = vmatprep.subr.bf16.mxu0 0
    %103 = vmatpush1.bf16.msra.mxu0 0
    %104 = vmatprep.mubr.bf16.mxu0 0
    %105 = vmatmul.mubr.bf16.gmra.mrb[0].mxu0 %v70
    %v106 = vpop.f32.mrb[0].mxu0
    %v107 = vadd.f32 %v54, %v106
    %v108 = vpop.f32.mrb[0].mxu0
    %v109 = vpop.f32.mrb[0].mxu0
    %v110 = vadd.f32 %v54, %v109
    %v111 = vpop.f32.mrb[0].mxu0
    %112 = vdwg.mxu0
    %v113 = vmax.f32 %v107, 0.0
    %v114 = vmax.f32 %v110, 0.0
    %v115 = vld [vmem:[%s3] sm:$0xf]
    %v116 = vld [vmem:[%s3 + $0x4] sm:$0xf]
    %v117 = vld [vmem:[%s3 + $0x8] sm:$0xf]
    %v118 = vld [vmem:[%s3 + $0xc] sm:$0xf]
    %v119 = vld [vmem:[%s3 + $0x10] sm:$0xf]
    %v120 = vld [vmem:[%s3 + $0x14] sm:$0xf]
    %v121 = vld [vmem:[%s3 + $0x18] sm:$0xf]
    %v122 = vld [vmem:[%s3 + $0x1c] sm:$0xf]
    %v123 = vld [vmem:[%s4] sm:$0x1]
    %v124 = vpack.c.bf16 %v114, %v113
    %v126 = vlaneseq
    %v127 = vshrl.u32 %v126, 7
    %v128 = vsub.s32 0, %v127
    %v129 = vrot.slane %v123, %v128
    %v139 = vunpack.c.l.b16 %v115
    %v140 = vunpack.c.l.b16 %v116
    %v141 = vunpack.c.l.b16 %v117
    %v142 = vunpack.c.l.b16 %v118
    %v143 = vunpack.c.l.b16 %v119
    %v144 = vunpack.c.l.b16 %v120
    %v145 = vunpack.c.l.b16 %v121
    %v146 = vunpack.c.l.b16 %v122
    %v147 = vpack.c.b16 %v140, %v139
    %v148 = vpack.c.b16 %v142, %v141
    %v149 = vpack.c.b16 %v144, %v143
    %v150 = vpack.c.b16 %v146, %v145
    %vm155 = vcmask 523264
    %v157 = vsel %vm155, %v124, 0
    %159 = vmatprep.subr.bf16.mxu0 0
    %160 = vmatpush1.bf16.msra.mxu0 %v147
    %161 = vmatprep.subr.bf16.mxu0 0
    %162 = vmatpush1.bf16.msra.mxu0 %v148
    %163 = vmatprep.subr.bf16.mxu0 0
    %164 = vmatpush1.bf16.msra.mxu0 %v149
    %165 = vmatprep.subr.bf16.mxu0 0
    %166 = vmatpush1.bf16.msra.mxu0 %v150
    %167 = vmatprep.subr.bf16.mxu0 0
    %168 = vmatpush1.bf16.msra.mxu0 0
    %169 = vmatprep.subr.bf16.mxu0 0
    %170 = vmatpush1.bf16.msra.mxu0 0
    %171 = vmatprep.subr.bf16.mxu0 0
    %172 = vmatpush1.bf16.msra.mxu0 0
    %173 = vmatprep.subr.bf16.mxu0 0
    %174 = vmatpush1.bf16.msra.mxu0 0
    %175 = vmatprep.subr.bf16.mxu0 0
    %176 = vmatpush1.bf16.msra.mxu0 0
    %177 = vmatprep.subr.bf16.mxu0 0
    %178 = vmatpush1.bf16.msra.mxu0 0
    %179 = vmatprep.subr.bf16.mxu0 0
    %180 = vmatpush1.bf16.msra.mxu0 0
    %181 = vmatprep.subr.bf16.mxu0 0
    %182 = vmatpush1.bf16.msra.mxu0 0
    %183 = vmatprep.subr.bf16.mxu0 0
    %184 = vmatpush1.bf16.msra.mxu0 0
    %185 = vmatprep.subr.bf16.mxu0 0
    %186 = vmatpush1.bf16.msra.mxu0 0
    %187 = vmatprep.subr.bf16.mxu0 0
    %188 = vmatpush1.bf16.msra.mxu0 0
    %189 = vmatprep.subr.bf16.mxu0 0
    %190 = vmatpush1.bf16.msra.mxu0 0
    %191 = vmatprep.mubr.bf16.mxu0 0
    %192 = vmatmul.mubr.bf16.gmra.mrb[0].mxu0 %v157
    %v193 = vpop.f32.mrb[0].mxu0
    %v194 = vadd.f32 %v129, %v193
    %v195 = vpop.f32.mrb[0].mxu0
    %v196 = vpop.f32.mrb[0].mxu0
    %v197 = vadd.f32 %v129, %v196
    %v198 = vpop.f32.mrb[0].mxu0
    %199 = vdwg.mxu0
    %v200 = vmax.f32 %v194, 0.0
    %v201 = vmax.f32 %v197, 0.0
    %v202 = vld [vmem:[%s5] sm:$0xf]
    %v203 = vld [vmem:[%s5 + $0x4] sm:$0xf]
    %v204 = vld [vmem:[%s5 + $0x8] sm:$0xf]
    %v205 = vld [vmem:[%s5 + $0xc] sm:$0xf]
    %v206 = vld [vmem:[%s5 + $0x10] sm:$0xf]
    %v207 = vld [vmem:[%s5 + $0x14] sm:$0xf]
    %v208 = vld [vmem:[%s5 + $0x18] sm:$0xf]
    %v209 = vld [vmem:[%s5 + $0x1c] sm:$0xf]
    %v210 = vld [vmem:[%s6] sm:$0x1]
    %v211 = vpack.c.bf16 %v201, %v200
    %v213 = vlaneseq
    %v214 = vshrl.u32 %v213, 7
    %v215 = vsub.s32 0, %v214
    %v216 = vrot.slane %v210, %v215
    %v226 = vunpack.c.l.b16 %v202
    %v227 = vunpack.c.l.b16 %v203
    %v228 = vunpack.c.l.b16 %v204
    %v229 = vunpack.c.l.b16 %v205
    %v230 = vunpack.c.l.b16 %v206
    %v231 = vunpack.c.l.b16 %v207
    %v232 = vunpack.c.l.b16 %v208
    %v233 = vunpack.c.l.b16 %v209
    %v234 = vpack.c.b16 %v227, %v226
    %v235 = vpack.c.b16 %v229, %v228
    %v236 = vpack.c.b16 %v231, %v230
    %v237 = vpack.c.b16 %v233, %v232
    %v243 = vsel %vm155, %v211, 0
    %245 = vmatprep.subr.bf16.mxu0 0
    %246 = vmatpush1.bf16.msra.mxu0 %v234
    %247 = vmatprep.subr.bf16.mxu0 0
    %248 = vmatpush1.bf16.msra.mxu0 %v235
    %249 = vmatprep.subr.bf16.mxu0 0
    %250 = vmatpush1.bf16.msra.mxu0 %v236
    %251 = vmatprep.subr.bf16.mxu0 0
    %252 = vmatpush1.bf16.msra.mxu0 %v237
    %253 = vmatprep.subr.bf16.mxu0 0
    %254 = vmatpush1.bf16.msra.mxu0 0
    %255 = vmatprep.subr.bf16.mxu0 0
    %256 = vmatpush1.bf16.msra.mxu0 0
    %257 = vmatprep.subr.bf16.mxu0 0
    %258 = vmatpush1.bf16.msra.mxu0 0
    %259 = vmatprep.subr.bf16.mxu0 0
    %260 = vmatpush1.bf16.msra.mxu0 0
    %261 = vmatprep.subr.bf16.mxu0 0
    %262 = vmatpush1.bf16.msra.mxu0 0
    %263 = vmatprep.subr.bf16.mxu0 0
    %264 = vmatpush1.bf16.msra.mxu0 0
    %265 = vmatprep.subr.bf16.mxu0 0
    %266 = vmatpush1.bf16.msra.mxu0 0
    %267 = vmatprep.subr.bf16.mxu0 0
    %268 = vmatpush1.bf16.msra.mxu0 0
    %269 = vmatprep.subr.bf16.mxu0 0
    %270 = vmatpush1.bf16.msra.mxu0 0
    %271 = vmatprep.subr.bf16.mxu0 0
    %272 = vmatpush1.bf16.msra.mxu0 0
    %273 = vmatprep.subr.bf16.mxu0 0
    %274 = vmatpush1.bf16.msra.mxu0 0
    %275 = vmatprep.subr.bf16.mxu0 0
    %276 = vmatpush1.bf16.msra.mxu0 0
    %277 = vmatprep.mubr.bf16.mxu0 0
    %278 = vmatmul.mubr.bf16.gmra.mrb[0].mxu0 %v243
    %v279 = vpop.f32.mrb[0].mxu0
    %v280 = vadd.f32 %v216, %v279
    %v281 = vpop.f32.mrb[0].mxu0
    %v282 = vpop.f32.mrb[0].mxu0
    %v283 = vadd.f32 %v216, %v282
    %v284 = vpop.f32.mrb[0].mxu0
    %285 = vdwg.mxu0
    %vm286 = vcmask 130048
    %287 = vst.msk [vmem:[#allocation5] sm:$0xff] %vm286, %v280
    %288 = vst.msk [vmem:[#allocation5 + $0x8] sm:$0xff] %vm286, %v283
    // Predicated region
    $region34: #{tpu_custom_call.1} parent=1 // pred_check
      _
    $region35: #{tpu_custom_call.1} parent=1 // pred_check_branch
      %290 = sbr.rel (0) target = $region37
    $region36: #{tpu_custom_call.1} parent=1 // pred_region
      %s292 = ssub.s32 256, 256
      %293 = vsyncadd [#allocation4], %s292
      %s294 = sshll.u32 [#allocation5], 4
      %s295 = int_to_ptr.vmem [resolvable:$true] %s294
      %300 = dma.vmem_to_hbm [thread:$0]  %s295, 256, %s7, [#allocation4], 128, 128, 8
    $region37: #{tpu_custom_call.1} parent=1 // pred_fallthru
      _
    // Predicated region
    $region38: #{tpu_custom_call.1} parent=1 // pred_check
      _
    $region39: #{tpu_custom_call.1} parent=1 // pred_check_branch
      %302 = sbr.rel (0) target = $region41
    $region40: #{tpu_custom_call.1} parent=1 // pred_region
      %303 = dma.done [#allocation4], 256
    $region41: #{tpu_custom_call.1} parent=1 // pred_fallthru
      _
    %304 = vsyncpa [#allocation3], 1
    %305 = vsyncpa [#allocation4], 1

</llo_original>
